<compile_context>
chip_gen: v7x
topology: tpu7x:2x2x1
jax: 0.10.0
libtpu: 0.0.40
codegen_flags: <defaults>
</compile_context>

<pallas_src>
import jax
import jax.numpy as jnp
import numpy as np
from jax.experimental import pallas as pl
from jax.experimental.pallas import tpu as pltpu

_HAS_BUFFERED = hasattr(pl, "Buffered")


def _prelu(x, a):
    return jnp.where(x >= 0, x, a * x)


# --------------------------------------------------------------------------- #
# Kernel
# --------------------------------------------------------------------------- #
def tac_q_kernel(x_ref,                      # (Bb, G, N, T)  native layout
                 w1_ref, b1_ref,             # (H, N), (H, 1)   TAC_input
                 w2_ref, b2_ref,             # (H, H), (H, 1)   TAC_mean
                 w3h_ref, w3m_ref, b3_ref,   # (N, H), (N, H), (N, 1)  TAC_output (split concat)
                 gamma_ref, beta_ref,        # (N, 1), (N, 1)   GroupNorm affine
                 alphas_ref,                 # SMEM (3,)        PReLU slopes
                 out_ref):                   # (Bb, G, N, T)
    Bb, G, N, T = x_ref.shape
    H = w1_ref.shape[0]
    mxu_dtype = w1_ref.dtype                 # bf16 in production, f32 for validation

    a1 = alphas_ref[0]
    a2 = alphas_ref[1]
    a3 = alphas_ref[2]
    inv_g = 1.0 / G                          # reciprocal multiplies, no divides
    inv_nt = 1.0 / (N * T)

    # Grid-constant operands, hoisted once per grid step.  The G-broadcasts of
    # the small weights are hoisted too (JAX does not CSE broadcast_in_dim).
    w1b = jnp.broadcast_to(w1_ref[...][None], (G, H, N))      # (G, H, N) mxu dtype
    w3hb = jnp.broadcast_to(w3h_ref[...][None], (G, N, H))    # (G, N, H) mxu dtype
    w2 = w2_ref[...]                                          # (H, H)    mxu dtype
    w3m = w3m_ref[...]                                        # (N, H)    mxu dtype
    b1 = b1_ref[...][None]                                    # (1, H, 1) f32
    b2 = b2_ref[...]                                          # (H, 1)    f32
    b3 = b3_ref[...]                                          # (N, 1)    f32
    gamma = gamma_ref[...][None]                              # (1, N, 1) f32
    beta = beta_ref[...][None]                                # (1, N, 1) f32

    def body(b, carry):
        # ---- TAC_input: all G groups in one batched MXU pass, T on lanes ----
        x_c = x_ref[b].astype(mxu_dtype)                              # (G, N, T)
        h = jnp.einsum('ghn,gnt->ght', w1b, x_c,
                       preferred_element_type=jnp.float32)            # (G, H, T)
        h = _prelu(h + b1, a1)

        # ---- mean over groups + TAC_mean (2-D dots, T on lanes) -------------
        m = jnp.sum(h, axis=0) * inv_g                                 # (H, T)
        m2 = _prelu(jnp.dot(w2, m.astype(mxu_dtype),
                            preferred_element_type=jnp.float32) + b2, a2)
        # shared "mean" half of the TAC_output concat-matmul; bias folded once.
        y_m = jnp.dot(w3m, m2.astype(mxu_dtype),
                      preferred_element_type=jnp.float32) + b3         # (N, T)

        # ---- "group" half of TAC_output: one batched pass over G ------------
        y = jnp.einsum('gnh,ght->gnt', w3hb, h.astype(mxu_dtype),
                       preferred_element_type=jnp.float32)             # (G, N, T)
        y = _prelu(y + y_m[None], a3)

        # ---- GroupNorm(1, N) per (b, g): fused single-pass statistics -------
        # TODO(synk): switch to a shifted / two-pass variance if bf16 inputs or
        # very long T make E[y^2]-mean^2 lose precision at production sizes.
        s = jnp.sum(jnp.sum(y, axis=2, keepdims=True), axis=1, keepdims=True)
        ss = jnp.sum(jnp.sum(y * y, axis=2, keepdims=True), axis=1, keepdims=True)
        mean = s * inv_nt                                              # (G, 1, 1)
        var = ss * inv_nt - mean * mean                                # (G, 1, 1)
        scale = jax.lax.rsqrt(var + 1e-5) * gamma                      # (G, N, 1)
        shift = beta - mean * scale                                    # (G, N, 1)

        # ---- residual + normalize + store in one fused VPU pass -------------
        # (x re-read from VMEM here so it is not kept live across the matmuls.)
        out_ref[b] = (x_ref[b].astype(jnp.float32)
                      + y * scale + shift).astype(out_ref.dtype)
        return carry

    jax.lax.fori_loop(0, Bb, body, 0)


# --------------------------------------------------------------------------- #
# Generation-aware tiling
# --------------------------------------------------------------------------- #
def _tpu_memory_info():
    """Returns (per-core VMEM bytes, chip-has-2-TensorCores heuristic)."""
    vmem_cap = 128 << 20
    try:
        vmem_cap = int(pltpu.get_tpu_info().vmem_capacity_bytes)
    except Exception:
        pass
    two_tc = vmem_cap <= (64 << 20)            # v7x: 64 MiB/TC, 2 TCs/chip
    try:
        kind = jax.devices()[0].device_kind.lower()
        if "v7" in kind or "tpu7" in kind:
            two_tc = True
    except Exception:
        pass
    return vmem_cap, two_tc


def _pick_tiling(B, G, N, T, H, x_itemsize, w_itemsize):
    vmem_cap, two_tc = _tpu_memory_info()

    weight_bytes = (H * N + H * H + 2 * N * H) * w_itemsize + (2 * H + 3 * N) * 4
    one_b_io = G * N * T * x_itemsize                   # one x block == one out block
    inter_bytes = G * T * (H + N) * (4 + w_itemsize)    # h / y f32 + MXU-dtype copies

    headroom = (10 << 20) if vmem_cap <= (64 << 20) else (16 << 20)
    avail = max(vmem_cap - headroom - 2 * weight_bytes - inter_bytes, 2 << 20)

    # Batch elements per grid step, assuming default double-buffered in + out.
    bb = max(1, min(B, avail // max(4 * one_b_io, 1)))
    if two_tc and B > 1:
        bb = min(bb, max(1, B // 4))     # keep >= 2 grid steps per TensorCore (v7x)
    # Exact grid: largest divisor of B not above bb.
    # TODO(synk): pad B (or mask a tail block) instead of shrinking bb when B is
    # an awkward prime, so the large lane-dense block path is preserved.
    while B % bb:
        bb -= 1

    blk = bb * one_b_io
    if 6 * blk <= avail and (B // bb) > 3:
        n_buf = 3         # spare VMEM: deeper pipeline hides residual DMA (v6e)
    elif 4 * blk <= avail:
        n_buf = 2         # default double buffering
    else:
        n_buf = 1         # v7x fallback: single-buffer the x / out streams
        # TODO(synk): T-chunked two-pass GroupNorm when even a single
        # (1, G, N, T) block cannot fit v7x VMEM at production T.

    need = 2 * n_buf * blk + 2 * weight_bytes + inter_bytes + (6 << 20)
    cap = (56 << 20) if vmem_cap <= (64 << 20) else min(vmem_cap - (8 << 20), 112 << 20)
    vmem_limit = int(min(max(need, 32 << 20), max(cap, 32 << 20)))
    return bb, n_buf, vmem_limit


# --------------------------------------------------------------------------- #
# pallas_call wrapper
# --------------------------------------------------------------------------- #
def _tac_q_pallas(x, w1, b1, w2, b2, w3h, w3m, b3, gamma, beta, alphas):
    B, G, N, T = x.shape
    H = w1.shape[0]
    bb, n_buf, vmem_limit = _pick_tiling(
        B, G, N, T, H, jnp.dtype(x.dtype).itemsize, jnp.dtype(w1.dtype).itemsize)

    io_kwargs = {}
    if n_buf != 2 and _HAS_BUFFERED:
        io_kwargs["pipeline_mode"] = pl.Buffered(n_buf)

    def const_spec(shape):
        rank = len(shape)
        return pl.BlockSpec(shape, lambda i, _r=rank: (0,) * _r)

    x_spec = pl.BlockSpec((bb, G, N, T), lambda i: (i, 0, 0, 0), **io_kwargs)
    out_spec = pl.BlockSpec((bb, G, N, T), lambda i: (i, 0, 0, 0), **io_kwargs)

    return pl.pallas_call(
        tac_q_kernel,
        out_shape=jax.ShapeDtypeStruct(x.shape, x.dtype),
        grid=(B // bb,),
        in_specs=[
            x_spec,
            const_spec((H, N)), const_spec((H, 1)),
            const_spec((H, H)), const_spec((H, 1)),
            const_spec((N, H)), const_spec((N, H)), const_spec((N, 1)),
            const_spec((N, 1)), const_spec((N, 1)),
            pl.BlockSpec(memory_space=pltpu.MemorySpace.SMEM),
        ],
        out_specs=out_spec,
        compiler_params=pltpu.CompilerParams(
            dimension_semantics=("parallel",),
            vmem_limit_bytes=vmem_limit),
    )(x, w1, b1, w2, b2, w3h, w3m, b3, gamma, beta, alphas)


def tac_q_forward(x, p, compute_dtype=jnp.bfloat16):
    """x: (B, G, N, T) — the PyTorch module's native layout, returned unchanged.

    compute_dtype is the MXU input dtype (bf16 default); accumulation and all
    VPU math (bias, PReLU, GroupNorm, residual) stay in float32.
    """
    B, G, N, T = x.shape
    H = p["w1"].shape[0]
    cd = jnp.dtype(compute_dtype)

    # Weights are used weight-on-the-left, so no transposes are needed at all.
    w1 = p["w1"].astype(cd)                     # (H, N)
    w2 = p["w2"].astype(cd)                     # (H, H)
    w3h = p["w3"][:, :H].astype(cd)             # (N, H)  "group" half of concat
    w3m = p["w3"][:, H:].astype(cd)             # (N, H)  "mean" half of concat
    b1 = p["b1"].reshape(H, 1).astype(jnp.float32)
    b2 = p["b2"].reshape(H, 1).astype(jnp.float32)
    b3 = p["b3"].reshape(N, 1).astype(jnp.float32)
    gamma = p["gamma"].reshape(N, 1).astype(jnp.float32)
    beta = p["beta"].reshape(N, 1).astype(jnp.float32)
    alphas = jnp.stack([p["a1"], p["a2"], p["a3"]]).astype(jnp.float32)   # (3,)

    return _tac_q_pallas(x, w1, b1, w2, b2, w3h, w3m, b3, gamma, beta, alphas)


# --------------------------------------------------------------------------- #
# Parameter init + pure-JAX reference (for validation)
# --------------------------------------------------------------------------- #
def init_params(key, input_size, hidden_size):
    """Deterministic parameter init matching the shapes in TAC_Q.__init__."""
    N, H = input_size, hidden_size
    ks = jax.random.split(key, 6)
    s1 = 1.0 / np.sqrt(N)
    s2 = 1.0 / np.sqrt(H)
    s3 = 1.0 / np.sqrt(2 * H)
    return dict(
        w1=jax.random.uniform(ks[0], (H, N), jnp.float32, -s1, s1),
        b1=jax.random.uniform(ks[1], (H,), jnp.float32, -s1, s1),
        a1=jnp.float32(0.25),
        w2=jax.random.uniform(ks[2], (H, H), jnp.float32, -s2, s2),
        b2=jax.random.uniform(ks[3], (H,), jnp.float32, -s2, s2),
        a2=jnp.float32(0.25),
        w3=jax.random.uniform(ks[4], (N, 2 * H), jnp.float32, -s3, s3),
        b3=jax.random.uniform(ks[5], (N,), jnp.float32, -s3, s3),
        a3=jnp.float32(0.25),
        gamma=jnp.ones((N,), jnp.float32),
        beta=jnp.zeros((N,), jnp.float32),
    )


def tac_q_reference(x, p):
    """Pure-JAX mirror of the PyTorch forward (QA_flag=False)."""
    B, G, N, T = x.shape
    prelu = lambda v, a: jnp.where(v >= 0, v, a * v)
    gi = jnp.transpose(x, (0, 3, 1, 2)).reshape(-1, N)
    go = prelu(gi @ p["w1"].T + p["b1"], p["a1"]).reshape(B, T, G, -1)
    gm = go.mean(2).reshape(B * T, -1)
    go = go.reshape(B * T, G, -1)
    gm = prelu(gm @ p["w2"].T + p["b2"], p["a2"])
    gm = jnp.broadcast_to(gm[:, None, :], go.shape)
    cat = jnp.concatenate([go, gm], axis=2)
    y = prelu(cat.reshape(-1, cat.shape[-1]) @ p["w3"].T + p["b3"], p["a3"])
    y = jnp.transpose(y.reshape(B, T, G, N), (0, 2, 3, 1))        # (B, G, N, T)
    yv = y.reshape(B * G, N, T)
    mean = yv.mean(axis=(1, 2), keepdims=True)
    var = yv.var(axis=(1, 2), keepdims=True)
    yn = (yv - mean) / jnp.sqrt(var + 1e-5)
    yn = yn * p["gamma"][None, :, None] + p["beta"][None, :, None]
    return x + yn.reshape(x.shape)


if __name__ == "__main__":
    B, G, N, T, H = 2, 4, 16, 16, 32          # input_size=N=16, hidden_size=H=32
    key = jax.random.PRNGKey(0)
    kx, kp = jax.random.split(key)
    x = jax.random.normal(kx, (B, G, N, T), jnp.float32)
    params = init_params(kp, N, H)

    ref = tac_q_reference(x, params)

    # Production path: bf16 MXU inputs, f32 accumulation / VPU math.
    out_bf16 = jax.block_until_ready(tac_q_forward(x, params))
    assert out_bf16.shape == x.shape
    np.testing.assert_allclose(np.asarray(out_bf16), np.asarray(ref),
                               rtol=5e-2, atol=5e-2)

    # Tight semantic check: same kernel with f32 MXU inputs.
    out_f32 = jax.block_until_ready(
        tac_q_forward(x, params, compute_dtype=jnp.float32))
    np.testing.assert_allclose(np.asarray(out_f32), np.asarray(ref),
                               rtol=5e-4, atol=5e-4)

    print("KERNEL_OK")
</pallas_src>

<mosaic_0001>
module attributes {stable_mosaic.version = 11 : i64} {
  func.func @tac_q_kernel(%arg0: i32, %arg1: memref<2x4x16x16xf32, #tpu.memory_space<vmem>>, %arg2: memref<32x16xbf16, #tpu.memory_space<vmem>>, %arg3: memref<32x1xf32, #tpu.memory_space<vmem>>, %arg4: memref<32x32xbf16, #tpu.memory_space<vmem>>, %arg5: memref<32x1xf32, #tpu.memory_space<vmem>>, %arg6: memref<16x32xbf16, #tpu.memory_space<vmem>>, %arg7: memref<16x32xbf16, #tpu.memory_space<vmem>>, %arg8: memref<16x1xf32, #tpu.memory_space<vmem>>, %arg9: memref<16x1xf32, #tpu.memory_space<vmem>>, %arg10: memref<16x1xf32, #tpu.memory_space<vmem>>, %arg11: memref<3xf32, #tpu.memory_space<smem>>, %arg12: memref<2x4x16x16xf32, #tpu.memory_space<vmem>>) attributes {dimension_semantics = [#tpu.dimension_semantics<parallel>], iteration_bounds = array<i64: 1>, scalar_prefetch = 0 : i64, scratch_operands = 0 : i64, tpu.core_type = #tpu.core_type<tc>, window_params = [{transform_indices = @transform_0, window_bounds = array<i64: 2, 4, 16, 16>}, {pipeline_mode = #tpu.pipeline_mode<synchronous>, transform_indices = @transform_1, window_bounds = array<i64: 32, 16>}, {pipeline_mode = #tpu.pipeline_mode<synchronous>, transform_indices = @transform_2, window_bounds = array<i64: 32, 1>}, {pipeline_mode = #tpu.pipeline_mode<synchronous>, transform_indices = @transform_3, window_bounds = array<i64: 32, 32>}, {pipeline_mode = #tpu.pipeline_mode<synchronous>, transform_indices = @transform_4, window_bounds = array<i64: 32, 1>}, {pipeline_mode = #tpu.pipeline_mode<synchronous>, transform_indices = @transform_5, window_bounds = array<i64: 16, 32>}, {pipeline_mode = #tpu.pipeline_mode<synchronous>, transform_indices = @transform_6, window_bounds = array<i64: 16, 32>}, {pipeline_mode = #tpu.pipeline_mode<synchronous>, transform_indices = @transform_7, window_bounds = array<i64: 16, 1>}, {pipeline_mode = #tpu.pipeline_mode<synchronous>, transform_indices = @transform_8, window_bounds = array<i64: 16, 1>}, {pipeline_mode = #tpu.pipeline_mode<synchronous>, transform_indices = @transform_9, window_bounds = array<i64: 16, 1>}, {transform_indices = @transform_10, window_bounds = array<i64: 3>}, {transform_indices = @transform_11, window_bounds = array<i64: 2, 4, 16, 16>}]} {
    %c0 = arith.constant 0 : index
    %0 = memref.load %arg11[%c0] : memref<3xf32, #tpu.memory_space<smem>>
    %c1 = arith.constant 1 : index
    %1 = memref.load %arg11[%c1] : memref<3xf32, #tpu.memory_space<smem>>
    %c2 = arith.constant 2 : index
    %2 = memref.load %arg11[%c2] : memref<3xf32, #tpu.memory_space<smem>>
    %c0_0 = arith.constant 0 : index
    %c0_1 = arith.constant 0 : index
    %3 = vector.load %arg2[%c0_0, %c0_1] : memref<32x16xbf16, #tpu.memory_space<vmem>>, vector<32x16xbf16>
    %4 = vector.shape_cast %3 : vector<32x16xbf16> to vector<1x32x16xbf16>
    %5 = vector.shape_cast %4 : vector<1x32x16xbf16> to vector<1x32x16xbf16>
    %6 = vector.broadcast %5 : vector<1x32x16xbf16> to vector<4x32x16xbf16>
    %c0_2 = arith.constant 0 : index
    %c0_3 = arith.constant 0 : index
    %7 = vector.load %arg6[%c0_2, %c0_3] : memref<16x32xbf16, #tpu.memory_space<vmem>>, vector<16x32xbf16>
    %8 = vector.shape_cast %7 : vector<16x32xbf16> to vector<1x16x32xbf16>
    %9 = vector.shape_cast %8 : vector<1x16x32xbf16> to vector<1x16x32xbf16>
    %10 = vector.broadcast %9 : vector<1x16x32xbf16> to vector<4x16x32xbf16>
    %c0_4 = arith.constant 0 : index
    %c0_5 = arith.constant 0 : index
    %11 = vector.load %arg4[%c0_4, %c0_5] : memref<32x32xbf16, #tpu.memory_space<vmem>>, vector<32x32xbf16>
    %c0_6 = arith.constant 0 : index
    %c0_7 = arith.constant 0 : index
    %12 = vector.load %arg7[%c0_6, %c0_7] : memref<16x32xbf16, #tpu.memory_space<vmem>>, vector<16x32xbf16>
    %c0_8 = arith.constant 0 : index
    %c0_9 = arith.constant 0 : index
    %13 = vector.load %arg3[%c0_8, %c0_9] : memref<32x1xf32, #tpu.memory_space<vmem>>, vector<32x1xf32>
    %14 = vector.shape_cast %13 : vector<32x1xf32> to vector<1x32x1xf32>
    %c0_10 = arith.constant 0 : index
    %c0_11 = arith.constant 0 : index
    %15 = vector.load %arg5[%c0_10, %c0_11] : memref<32x1xf32, #tpu.memory_space<vmem>>, vector<32x1xf32>
    %c0_12 = arith.constant 0 : index
    %c0_13 = arith.constant 0 : index
    %16 = vector.load %arg8[%c0_12, %c0_13] : memref<16x1xf32, #tpu.memory_space<vmem>>, vector<16x1xf32>
    %c0_14 = arith.constant 0 : index
    %c0_15 = arith.constant 0 : index
    %17 = vector.load %arg9[%c0_14, %c0_15] : memref<16x1xf32, #tpu.memory_space<vmem>>, vector<16x1xf32>
    %18 = vector.shape_cast %17 : vector<16x1xf32> to vector<1x16x1xf32>
    %c0_16 = arith.constant 0 : index
    %c0_17 = arith.constant 0 : index
    %19 = vector.load %arg10[%c0_16, %c0_17] : memref<16x1xf32, #tpu.memory_space<vmem>>, vector<16x1xf32>
    %20 = vector.shape_cast %19 : vector<16x1xf32> to vector<1x16x1xf32>
    %c0_i32 = arith.constant 0 : i32
    %c2_i32 = arith.constant 2 : i32
    %21 = arith.addi %c0_i32, %c2_i32 : i32
    %c1_i32 = arith.constant 1 : i32
    scf.for %arg13 = %c0_i32 to %21 step %c1_i32  : i32 {
      %22 = arith.index_cast %arg13 : i32 to index
      %c0_19 = arith.constant 0 : index
      %c0_20 = arith.constant 0 : index
      %c0_21 = arith.constant 0 : index
      %23 = vector.load %arg1[%22, %c0_19, %c0_20, %c0_21] : memref<2x4x16x16xf32, #tpu.memory_space<vmem>>, vector<1x4x16x16xf32>
      %24 = vector.shape_cast %23 : vector<1x4x16x16xf32> to vector<4x16x16xf32>
      %25 = arith.truncf %24 : vector<4x16x16xf32> to vector<4x16x16xbf16>
      "tpu.trace_start"() <{level = 10 : i32, message = "ghn,gnt->ght"}> : () -> ()
      %cst = arith.constant dense<0.000000e+00> : vector<4x32x16xf32>
      %26 = tpu.matmul %6, %25, %cst {dimension_numbers = #tpu.dot_dimension_numbers<[2], [1], [1], [2], [0, 0, 0, 1, 1, 2], [0], [0]>} : vector<4x32x16xbf16>, vector<4x16x16xbf16>, vector<4x32x16xf32> -> vector<4x32x16xf32>
      "tpu.trace_stop"() : () -> ()
      %27 = vector.broadcast %14 : vector<1x32x1xf32> to vector<4x32x16xf32>
      %28 = arith.addf %26, %27 : vector<4x32x16xf32>
      %cst_22 = arith.constant 0.000000e+00 : f32
      %29 = vector.broadcast %cst_22 : f32 to vector<4x32x16xf32>
      %30 = arith.cmpf oge, %28, %29 : vector<4x32x16xf32>
      %31 = vector.broadcast %0 : f32 to vector<4x32x16xf32>
      %32 = arith.mulf %31, %28 : vector<4x32x16xf32>
      %33 = arith.select %30, %28, %32 : vector<4x32x16xi1>, vector<4x32x16xf32>
      %cst_23 = arith.constant dense<0.000000e+00> : vector<32x16xf32>
      %34 = vector.multi_reduction <add>, %33, %cst_23 [0] : vector<4x32x16xf32> to vector<32x16xf32>
      %cst_24 = arith.constant 2.500000e-01 : f32
      %35 = vector.broadcast %cst_24 : f32 to vector<32x16xf32>
      %36 = arith.mulf %34, %35 : vector<32x16xf32>
      %37 = arith.truncf %36 : vector<32x16xf32> to vector<32x16xbf16>
      %cst_25 = arith.constant dense<0.000000e+00> : vector<32x16xf32>
      %38 = tpu.matmul %11, %37, %cst_25 {dimension_numbers = #tpu.dot_dimension_numbers<[1], [0], [0], [1], [0, 0, 1, 1], [], []>} : vector<32x32xbf16>, vector<32x16xbf16>, vector<32x16xf32> -> vector<32x16xf32>
      %39 = vector.broadcast %15 : vector<32x1xf32> to vector<32x16xf32>
      %40 = arith.addf %38, %39 : vector<32x16xf32>
      %cst_26 = arith.constant 0.000000e+00 : f32
      %41 = vector.broadcast %cst_26 : f32 to vector<32x16xf32>
      %42 = arith.cmpf oge, %40, %41 : vector<32x16xf32>
      %43 = vector.broadcast %1 : f32 to vector<32x16xf32>
      %44 = arith.mulf %43, %40 : vector<32x16xf32>
      %45 = arith.select %42, %40, %44 : vector<32x16xi1>, vector<32x16xf32>
      %46 = arith.truncf %45 : vector<32x16xf32> to vector<32x16xbf16>
      %cst_27 = arith.constant dense<0.000000e+00> : vector<16x16xf32>
      %47 = tpu.matmul %12, %46, %cst_27 {dimension_numbers = #tpu.dot_dimension_numbers<[1], [0], [0], [1], [0, 0, 1, 1], [], []>} : vector<16x32xbf16>, vector<32x16xbf16>, vector<16x16xf32> -> vector<16x16xf32>
      %48 = vector.broadcast %16 : vector<16x1xf32> to vector<16x16xf32>
      %49 = arith.addf %47, %48 : vector<16x16xf32>
      %50 = arith.truncf %33 : vector<4x32x16xf32> to vector<4x32x16xbf16>
      "tpu.trace_start"() <{level = 10 : i32, message = "gnh,ght->gnt"}> : () -> ()
      %cst_28 = arith.constant dense<0.000000e+00> : vector<4x16x16xf32>
      %51 = tpu.matmul %10, %50, %cst_28 {dimension_numbers = #tpu.dot_dimension_numbers<[2], [1], [1], [2], [0, 0, 0, 1, 1, 2], [0], [0]>} : vector<4x16x32xbf16>, vector<4x32x16xbf16>, vector<4x16x16xf32> -> vector<4x16x16xf32>
      "tpu.trace_stop"() : () -> ()
      %52 = vector.shape_cast %49 : vector<16x16xf32> to vector<1x16x16xf32>
      %53 = vector.broadcast %52 : vector<1x16x16xf32> to vector<4x16x16xf32>
      %54 = arith.addf %51, %53 : vector<4x16x16xf32>
      %cst_29 = arith.constant 0.000000e+00 : f32
      %55 = vector.broadcast %cst_29 : f32 to vector<4x16x16xf32>
      %56 = arith.cmpf oge, %54, %55 : vector<4x16x16xf32>
      %57 = vector.broadcast %2 : f32 to vector<4x16x16xf32>
      %58 = arith.mulf %57, %54 : vector<4x16x16xf32>
      %59 = arith.select %56, %54, %58 : vector<4x16x16xi1>, vector<4x16x16xf32>
      %cst_30 = arith.constant dense<0.000000e+00> : vector<4x16xf32>
      %60 = vector.multi_reduction <add>, %59, %cst_30 [2] : vector<4x16x16xf32> to vector<4x16xf32>
      %61 = vector.shape_cast %60 : vector<4x16xf32> to vector<4x16x1xf32>
      %cst_31 = arith.constant dense<0.000000e+00> : vector<4x1xf32>
      %62 = vector.multi_reduction <add>, %61, %cst_31 [1] : vector<4x16x1xf32> to vector<4x1xf32>
      %63 = vector.shape_cast %62 : vector<4x1xf32> to vector<4x1x1xf32>
      %64 = arith.mulf %59, %59 : vector<4x16x16xf32>
      %cst_32 = arith.constant dense<0.000000e+00> : vector<4x16xf32>
      %65 = vector.multi_reduction <add>, %64, %cst_32 [2] : vector<4x16x16xf32> to vector<4x16xf32>
      %66 = vector.shape_cast %65 : vector<4x16xf32> to vector<4x16x1xf32>
      %cst_33 = arith.constant dense<0.000000e+00> : vector<4x1xf32>
      %67 = vector.multi_reduction <add>, %66, %cst_33 [1] : vector<4x16x1xf32> to vector<4x1xf32>
      %68 = vector.shape_cast %67 : vector<4x1xf32> to vector<4x1x1xf32>
      %cst_34 = arith.constant 3.906250e-03 : f32
      %69 = vector.broadcast %cst_34 : f32 to vector<4x1x1xf32>
      %70 = arith.mulf %63, %69 : vector<4x1x1xf32>
      %cst_35 = arith.constant 3.906250e-03 : f32
      %71 = vector.broadcast %cst_35 : f32 to vector<4x1x1xf32>
      %72 = arith.mulf %68, %71 : vector<4x1x1xf32>
      %73 = arith.mulf %70, %70 : vector<4x1x1xf32>
      %74 = arith.subf %72, %73 : vector<4x1x1xf32>
      %cst_36 = arith.constant 9.99999974E-6 : f32
      %75 = vector.broadcast %cst_36 : f32 to vector<4x1x1xf32>
      %76 = arith.addf %74, %75 : vector<4x1x1xf32>
      %77 = math.rsqrt %76 : vector<4x1x1xf32>
      %78 = vector.broadcast %77 : vector<4x1x1xf32> to vector<4x16x1xf32>
      %79 = vector.broadcast %18 : vector<1x16x1xf32> to vector<4x16x1xf32>
      %80 = arith.mulf %78, %79 : vector<4x16x1xf32>
      %81 = vector.broadcast %70 : vector<4x1x1xf32> to vector<4x16x1xf32>
      %82 = arith.mulf %81, %80 : vector<4x16x1xf32>
      %83 = vector.broadcast %20 : vector<1x16x1xf32> to vector<4x16x1xf32>
      %84 = arith.subf %83, %82 : vector<4x16x1xf32>
      %85 = arith.index_cast %arg13 : i32 to index
      %c0_37 = arith.constant 0 : index
      %c0_38 = arith.constant 0 : index
      %c0_39 = arith.constant 0 : index
      %86 = vector.load %arg1[%85, %c0_37, %c0_38, %c0_39] : memref<2x4x16x16xf32, #tpu.memory_space<vmem>>, vector<1x4x16x16xf32>
      %87 = vector.shape_cast %86 : vector<1x4x16x16xf32> to vector<4x16x16xf32>
      %88 = vector.broadcast %80 : vector<4x16x1xf32> to vector<4x16x16xf32>
      %89 = arith.mulf %59, %88 : vector<4x16x16xf32>
      %90 = arith.addf %87, %89 : vector<4x16x16xf32>
      %91 = vector.broadcast %84 : vector<4x16x1xf32> to vector<4x16x16xf32>
      %92 = arith.addf %90, %91 : vector<4x16x16xf32>
      %93 = arith.index_cast %arg13 : i32 to index
      %c0_40 = arith.constant 0 : index
      %c0_41 = arith.constant 0 : index
      %c0_42 = arith.constant 0 : index
      %94 = vector.load %arg12[%93, %c0_40, %c0_41, %c0_42] : memref<2x4x16x16xf32, #tpu.memory_space<vmem>>, vector<1x4x16x16xf32>
      %95 = vector.shape_cast %94 : vector<1x4x16x16xf32> to vector<4x16x16xf32>
      %96 = vector.shape_cast %92 : vector<4x16x16xf32> to vector<1x4x16x16xf32>
      tpu.vector_store %arg12[%93, %c0_40, %c0_41, %c0_42], %96 {strides = array<i32>} : memref<2x4x16x16xf32, #tpu.memory_space<vmem>>, vector<1x4x16x16xf32>,
    }
    %c2_i32_18 = arith.constant 2 : i32
    return
  }
  func.func @transform_0(%arg0: i32) -> (i32, i32, i32, i32) {
    %c0_i32 = arith.constant 0 : i32
    %c0_i32_0 = arith.constant 0 : i32
    %c0_i32_1 = arith.constant 0 : i32
    %c0_i32_2 = arith.constant 0 : i32
    return %arg0, %c0_i32, %c0_i32_0, %c0_i32_1 : i32, i32, i32, i32
  }
  func.func @transform_1(%arg0: i32) -> (i32, i32) {
    %c0_i32 = arith.constant 0 : i32
    %c0_i32_0 = arith.constant 0 : i32
    %c0_i32_1 = arith.constant 0 : i32
    return %c0_i32, %c0_i32_0 : i32, i32
  }
  func.func @transform_2(%arg0: i32) -> (i32, i32) {
    %c0_i32 = arith.constant 0 : i32
    %c0_i32_0 = arith.constant 0 : i32
    %c0_i32_1 = arith.constant 0 : i32
    return %c0_i32, %c0_i32_0 : i32, i32
  }
  func.func @transform_3(%arg0: i32) -> (i32, i32) {
    %c0_i32 = arith.constant 0 : i32
    %c0_i32_0 = arith.constant 0 : i32
    %c0_i32_1 = arith.constant 0 : i32
    return %c0_i32, %c0_i32_0 : i32, i32
  }
  func.func @transform_4(%arg0: i32) -> (i32, i32) {
    %c0_i32 = arith.constant 0 : i32
    %c0_i32_0 = arith.constant 0 : i32
    %c0_i32_1 = arith.constant 0 : i32
    return %c0_i32, %c0_i32_0 : i32, i32
  }
  func.func @transform_5(%arg0: i32) -> (i32, i32) {
    %c0_i32 = arith.constant 0 : i32
    %c0_i32_0 = arith.constant 0 : i32
    %c0_i32_1 = arith.constant 0 : i32
    return %c0_i32, %c0_i32_0 : i32, i32
  }
  func.func @transform_6(%arg0: i32) -> (i32, i32) {
    %c0_i32 = arith.constant 0 : i32
    %c0_i32_0 = arith.constant 0 : i32
    %c0_i32_1 = arith.constant 0 : i32
    return %c0_i32, %c0_i32_0 : i32, i32
  }
  func.func @transform_7(%arg0: i32) -> (i32, i32) {
    %c0_i32 = arith.constant 0 : i32
    %c0_i32_0 = arith.constant 0 : i32
    %c0_i32_1 = arith.constant 0 : i32
    return %c0_i32, %c0_i32_0 : i32, i32
  }
  func.func @transform_8(%arg0: i32) -> (i32, i32) {
    %c0_i32 = arith.constant 0 : i32
    %c0_i32_0 = arith.constant 0 : i32
    %c0_i32_1 = arith.constant 0 : i32
    return %c0_i32, %c0_i32_0 : i32, i32
  }
  func.func @transform_9(%arg0: i32) -> (i32, i32) {
    %c0_i32 = arith.constant 0 : i32
    %c0_i32_0 = arith.constant 0 : i32
    %c0_i32_1 = arith.constant 0 : i32
    return %c0_i32, %c0_i32_0 : i32, i32
  }
  func.func @transform_10(%arg0: i32) -> i32 {
    %c0_i32 = arith.constant 0 : i32
    %c0_i32_0 = arith.constant 0 : i32
    return %c0_i32 : i32
  }
  func.func @transform_11(%arg0: i32) -> (i32, i32, i32, i32) {
    %c0_i32 = arith.constant 0 : i32
    %c0_i32_0 = arith.constant 0 : i32
    %c0_i32_1 = arith.constant 0 : i32
    %c0_i32_2 = arith.constant 0 : i32
    return %arg0, %c0_i32, %c0_i32_0, %c0_i32_1 : i32, i32, i32, i32
  }
}

</mosaic_0001>

<llo_original>
// kernel: tpu_custom_call.1
$region0: #{tpu_custom_call.1}
  #allocation0 [shape = 'u32[]', space=smem, size = 0x4, offset = 0x4, fixed_abs, tag = 'smem constant byte address 0x4 - core index']
  #allocation1 [shape = 'u32[144,128]{1,0:T(1,128)}', space=vmem, size = 0x12000, scoped, tag = 'internal scratch']
  %s0 = inlined_call_operand.vmem [shape: f32[2,4,16,16], index: 0, kind: input, shape index: {}]
  %s1 = inlined_call_operand.vmem [shape: bf16[32,16], index: 1, kind: input, shape index: {}]
  %s2 = inlined_call_operand.vmem [shape: f32[32,1], index: 2, kind: input, shape index: {}]
  %s3 = inlined_call_operand.vmem [shape: bf16[32,32], index: 3, kind: input, shape index: {}]
  %s4 = inlined_call_operand.vmem [shape: f32[32,1], index: 4, kind: input, shape index: {}]
  %s5 = inlined_call_operand.vmem [shape: bf16[16,32], index: 5, kind: input, shape index: {}]
  %s6 = inlined_call_operand.vmem [shape: bf16[16,32], index: 6, kind: input, shape index: {}]
  %s7 = inlined_call_operand.vmem [shape: f32[16,1], index: 7, kind: input, shape index: {}]
  %s8 = inlined_call_operand.vmem [shape: f32[16,1], index: 8, kind: input, shape index: {}]
  %s9 = inlined_call_operand.vmem [shape: f32[16,1], index: 9, kind: input, shape index: {}]
  %s10 = inlined_call_operand.vmem [shape: f32[3], index: 10, kind: input, shape index: {}]
  %s11 = inlined_call_operand.hbm [shape: f32[2,4,16,16], index: 11, kind: output, shape index: {}]
  %s12 = sld [smem:[#allocation0]]
  $region65: #{tpu_custom_call.1} parent=0
    _
  %s14 = ssub.s32 1, %s12
  %s15 = scalar_select 0, %s14, %s12
  $region1: #{tpu_custom_call.1} parent=0
    #allocation2 [shape = 'u8[512]{0}', space=smem, size = 0x200, scoped, tag = 'input window, operand 10, single buffered']
    #allocation3 [shape = 's32[1]{0}', space=sflag, size = 0x4, scoped, tag = 'scoped memory for tpu_custom_call.1']
    #allocation4 [shape = 's32[1]{0}', space=sflag, size = 0x4, scoped, tag = 'scoped memory for tpu_custom_call.1']
    #allocation5 [shape = 'u8[65536]{0}', space=vmem, size = 0x10000, scoped, tag = 'output window, operand 0, single buffered']
    %16 = vsyncpa [#allocation4], 0
    %17 = vsyncpa [#allocation3], 0
    // Predicated region
    $region2: #{tpu_custom_call.1} parent=1 // pred_check
      _
    $region3: #{tpu_custom_call.1} parent=1 // pred_check_branch
      %19 = sbr.rel (0) target = $region5
    $region4: #{tpu_custom_call.1} parent=1 // pred_region
      _
    $region5: #{tpu_custom_call.1} parent=1 // pred_fallthru
      _
    // Predicated region
    $region6: #{tpu_custom_call.1} parent=1 // pred_check
      _
    $region7: #{tpu_custom_call.1} parent=1 // pred_check_branch
      %21 = sbr.rel (0) target = $region9
    $region8: #{tpu_custom_call.1} parent=1 // pred_region
      _
    $region9: #{tpu_custom_call.1} parent=1 // pred_fallthru
      _
    // Predicated region
    $region10: #{tpu_custom_call.1} parent=1 // pred_check
      _
    $region11: #{tpu_custom_call.1} parent=1 // pred_check_branch
      %23 = sbr.rel (0) target = $region13
    $region12: #{tpu_custom_call.1} parent=1 // pred_region
      _
    $region13: #{tpu_custom_call.1} parent=1 // pred_fallthru
      _
    // Predicated region
    $region14: #{tpu_custom_call.1} parent=1 // pred_check
      _
    $region15: #{tpu_custom_call.1} parent=1 // pred_check_branch
      %25 = sbr.rel (0) target = $region17
    $region16: #{tpu_custom_call.1} parent=1 // pred_region
      _
    $region17: #{tpu_custom_call.1} parent=1 // pred_fallthru
      _
    // Predicated region
    $region18: #{tpu_custom_call.1} parent=1 // pred_check
      _
    $region19: #{tpu_custom_call.1} parent=1 // pred_check_branch
      %27 = sbr.rel (0) target = $region21
    $region20: #{tpu_custom_call.1} parent=1 // pred_region
      _
    $region21: #{tpu_custom_call.1} parent=1 // pred_fallthru
      _
    // Predicated region
    $region22: #{tpu_custom_call.1} parent=1 // pred_check
      _
    $region23: #{tpu_custom_call.1} parent=1 // pred_check_branch
      %29 = sbr.rel (0) target = $region25
    $region24: #{tpu_custom_call.1} parent=1 // pred_region
      _
    $region25: #{tpu_custom_call.1} parent=1 // pred_fallthru
      _
    // Predicated region
    $region26: #{tpu_custom_call.1} parent=1 // pred_check
      _
    $region27: #{tpu_custom_call.1} parent=1 // pred_check_branch
      %31 = sbr.rel (0) target = $region29
    $region28: #{tpu_custom_call.1} parent=1 // pred_region
      _
    $region29: #{tpu_custom_call.1} parent=1 // pred_fallthru
      _
    // Predicated region
    $region30: #{tpu_custom_call.1} parent=1 // pred_check
      _
    $region31: #{tpu_custom_call.1} parent=1 // pred_check_branch
      %33 = sbr.rel (0) target = $region33
    $region32: #{tpu_custom_call.1} parent=1 // pred_region
      _
    $region33: #{tpu_custom_call.1} parent=1 // pred_fallthru
      _
    // Predicated region
    $region34: #{tpu_custom_call.1} parent=1 // pred_check
      _
    $region35: #{tpu_custom_call.1} parent=1 // pred_check_branch
      %35 = sbr.rel (0) target = $region37
    $region36: #{tpu_custom_call.1} parent=1 // pred_region
      _
    $region37: #{tpu_custom_call.1} parent=1 // pred_fallthru
      _
    // Predicated region
    $region38: #{tpu_custom_call.1} parent=1 // pred_check
      _
    $region39: #{tpu_custom_call.1} parent=1 // pred_check_branch
      %37 = sbr.rel (0) target = $region41
    $region40: #{tpu_custom_call.1} parent=1 // pred_region
      _
    $region41: #{tpu_custom_call.1} parent=1 // pred_fallthru
      _
    // Predicated region
    $region42: #{tpu_custom_call.1} parent=1 // pred_check
      _
    $region43: #{tpu_custom_call.1} parent=1 // pred_check_branch
      %39 = sbr.rel (0) target = $region45
    $region44: #{tpu_custom_call.1} parent=1 // pred_region
      %s41 = ssub.s32 16, 16
      %42 = vsyncadd [#allocation4], %s41
      %s44 = sshll.u32 %s10, 4
      %s45 = int_to_ptr.vmem [resolvable:$true] %s44
      %47 = dma.vmem_to_smem %s45, 16, [#allocation2], [#allocation4]
    $region45: #{tpu_custom_call.1} parent=1 // pred_fallthru
      _
    // Predicated region
    $region46: #{tpu_custom_call.1} parent=1 // pred_check
      _
    $region47: #{tpu_custom_call.1} parent=1 // pred_check_branch
      %49 = sbr.rel (0) target = $region49
    $region48: #{tpu_custom_call.1} parent=1 // pred_region
      %50 = dma.done [#allocation4], 16
    $region49: #{tpu_custom_call.1} parent=1 // pred_fallthru
      _
    %51 = sfence
    %s53 = sld [smem:[#allocation2]]
    %s54 = sld [smem:[#allocation2 + $0x1]]
    %s55 = sld [smem:[#allocation2 + $0x2]]
    %v56 = vld [vmem:[%s1] sm:$0xf]
    %v57 = vld [vmem:[%s1 + $0x4] sm:$0xf]
    %v58 = vld [vmem:[%s1 + $0x8] sm:$0xf]
    %v59 = vld [vmem:[%s1 + $0xc] sm:$0xf]
    %v60 = vld [vmem:[%s5] sm:$0xf]
    %v61 = vld [vmem:[%s5 + $0x4] sm:$0xf]
    %v62 = vld [vmem:[%s3] sm:$0xf]
    %v63 = vld [vmem:[%s3 + $0x4] sm:$0xf]
    %v64 = vld [vmem:[%s3 + $0x8] sm:$0xf]
    %v65 = vld [vmem:[%s3 + $0xc] sm:$0xf]
    %v66 = vld [vmem:[%s6] sm:$0xf]
    %v67 = vld [vmem:[%s6 + $0x4] sm:$0xf]
    %v68 = vld [vmem:[%s2] sm:$0xff]
    %v69 = vld [vmem:[%s2 + $0x8] sm:$0xff]
    %v70 = vld [vmem:[%s2 + $0x10] sm:$0xff]
    %v71 = vld [vmem:[%s2 + $0x18] sm:$0xff]
    %v72 = vld [vmem:[%s4] sm:$0xff]
    %v73 = vld [vmem:[%s4 + $0x8] sm:$0xff]
    %v74 = vld [vmem:[%s4 + $0x10] sm:$0xff]
    %v75 = vld [vmem:[%s4 + $0x18] sm:$0xff]
    %v76 = vld [vmem:[%s7] sm:$0xff]
    %v77 = vld [vmem:[%s7 + $0x8] sm:$0xff]
    %v78 = vld [vmem:[%s8] sm:$0xff]
    %v79 = vld [vmem:[%s8 + $0x8] sm:$0xff]
    %v80 = vld [vmem:[%s9] sm:$0xff]
    %v81 = vld [vmem:[%s9 + $0x8] sm:$0xff]
    loop: start=0, step=1, limit=2
    $region50: #{tpu_custom_call.1} parent=1 // loop_pre_header
      _
    $region51: #{tpu_custom_call.1} parent=1 // loop_header
      %s83 = sphi 0, %s87
      %p84 = scmp.ge.s32.totalorder %s83, 2
    $region52: #{tpu_custom_call.1} parent=1 // loop_header_branch
      %86 = sbr.rel (%p84) target = $region56
    $region53: #{tpu_custom_call.1} parent=1 // loop_body
      %s88 = smul.u32 %s83, 64
      %s89 = scalar_lea.vmem %s0, %s88
      %v90 = vld [vmem:[%s89] sm:$0xff]
      %v91 = vld [vmem:[%s89 + $0x8] sm:$0xff]
      %v92 = vld [vmem:[%s89 + $0x10] sm:$0xff]
      %v93 = vld [vmem:[%s89 + $0x18] sm:$0xff]
      %v94 = vld [vmem:[%s89 + $0x20] sm:$0xff]
      %v95 = vld [vmem:[%s89 + $0x28] sm:$0xff]
      %v96 = vld [vmem:[%s89 + $0x30] sm:$0xff]
      %v97 = vld [vmem:[%s89 + $0x38] sm:$0xff]
      %v98 = vpack.c.bf16 %v91, %v90
      %v99 = vpack.c.bf16 %v93, %v92
      %v100 = vpack.c.bf16 %v95, %v94
      %v101 = vpack.c.bf16 %v97, %v96
      %103 = vset.pattern.permute.xlu0 0
      %104 = vperm.xlu0 %103, %v68
      %v105 = vpop.permute.xlu0 %104
      %108 = vset.pattern.permute.xlu0 0
      %109 = vperm.xlu0 %108, %v69
      %v110 = vpop.permute.xlu0 %109
      %113 = vset.pattern.permute.xlu0 0
      %114 = vperm.xlu0 %113, %v70
      %v115 = vpop.permute.xlu0 %114
      %118 = vset.pattern.permute.xlu0 0
      %119 = vperm.xlu0 %118, %v71
      %v120 = vpop.permute.xlu0 %119
      %v126 = vunpack.c.l.b16 %v56
      %v127 = vunpack.c.l.b16 %v57
      %v128 = vunpack.c.l.b16 %v58
      %v129 = vunpack.c.l.b16 %v59
      %v130 = vpack.c.b16 %v127, %v126
      %v131 = vpack.c.b16 %v129, %v128
      %vm132 = vcmask 130048
      %v134 = vsel %vm132, %v130, 0
      %v137 = vsel %vm132, %v131, 0
      %139 = vmatprep.subr.bf16.mxu0 0
      %140 = vmatpush1.bf16.msra.mxu0 %v98
      %141 = vmatprep.subr.bf16.mxu0 0
      %142 = vmatpush1.bf16.msra.mxu0 0
      %143 = vmatprep.subr.bf16.mxu0 0
      %144 = vmatpush1.bf16.msra.mxu0 0
      %145 = vmatprep.subr.bf16.mxu0 0
      %146 = vmatpush1.bf16.msra.mxu0 0
      %147 = vmatprep.subr.bf16.mxu0 0
      %148 = vmatpush1.bf16.msra.mxu0 0
      %149 = vmatprep.subr.bf16.mxu0 0
      %150 = vmatpush1.bf16.msra.mxu0 0
      %151 = vmatprep.subr.bf16.mxu0 0
      %152 = vmatpush1.bf16.msra.mxu0 0
      %153 = vmatprep.subr.bf16.mxu0 0
      %154 = vmatpush1.bf16.msra.mxu0 0
      %155 = vmatprep.subr.bf16.mxu0 0
      %156 = vmatpush1.bf16.msra.mxu0 0
      %157 = vmatprep.subr.bf16.mxu0 0
      %158 = vmatpush1.bf16.msra.mxu0 0
      %159 = vmatprep.subr.bf16.mxu0 0
      %160 = vmatpush1.bf16.msra.mxu0 0
      %161 = vmatprep.subr.bf16.mxu0 0
      %162 = vmatpush1.bf16.msra.mxu0 0
      %163 = vmatprep.subr.bf16.mxu0 0
      %164 = vmatpush1.bf16.msra.mxu0 0
      %165 = vmatprep.subr.bf16.mxu0 0
      %166 = vmatpush1.bf16.msra.mxu0 0
      %167 = vmatprep.subr.bf16.mxu0 0
      %168 = vmatpush1.bf16.msra.mxu0 0
      %169 = vmatprep.subr.bf16.mxu0 0
      %170 = vmatpush1.bf16.msra.mxu0 0
      %171 = vmatprep.mubr.bf16.mxu0 0
      %172 = vmatmul.mubr.bf16.gmra.mrb[0].mxu0 %v134
      %v173 = vpop.f32.mrb[0].mxu0
      %v174 = vadd.f32 %v105, %v173
      %v175 = vpop.f32.mrb[0].mxu0
      %v176 = vpop.f32.mrb[0].mxu0
      %v177 = vadd.f32 %v110, %v176
      %v178 = vpop.f32.mrb[0].mxu0
      %179 = vmatprep.mubr.bf16.mxu0 0
      %180 = vmatmul.mubr.bf16.gmra.mrb[0].mxu0 %v137
      %v181 = vpop.f32.mrb[0].mxu0
      %v182 = vadd.f32 %v115, %v181
      %v183 = vpop.f32.mrb[0].mxu0
      %v184 = vpop.f32.mrb[0].mxu0
      %v185 = vadd.f32 %v120, %v184
      %v186 = vpop.f32.mrb[0].mxu0
      %187 = vdwg.mxu0
      %188 = vmatprep.subr.bf16.mxu0 0
      %189 = vmatpush1.bf16.msra.mxu0 %v99
      %190 = vmatprep.subr.bf16.mxu0 0
      %191 = vmatpush1.bf16.msra.mxu0 0
      %192 = vmatprep.subr.bf16.mxu0 0
      %193 = vmatpush1.bf16.msra.mxu0 0
      %194 = vmatprep.subr.bf16.mxu0 0
      %195 = vmatpush1.bf16.msra.mxu0 0
      %196 = vmatprep.subr.bf16.mxu0 0
      %197 = vmatpush1.bf16.msra.mxu0 0
      %198 = vmatprep.subr.bf16.mxu0 0
      %199 = vmatpush1.bf16.msra.mxu0 0
      %200 = vmatprep.subr.bf16.mxu0 0
      %201 = vmatpush1.bf16.msra.mxu0 0
      %202 = vmatprep.subr.bf16.mxu0 0
      %203 = vmatpush1.bf16.msra.mxu0 0
      %204 = vmatprep.subr.bf16.mxu0 0
      %205 = vmatpush1.bf16.msra.mxu0 0
      %206 = vmatprep.subr.bf16.mxu0 0
      %207 = vmatpush1.bf16.msra.mxu0 0
      %208 = vmatprep.subr.bf16.mxu0 0
      %209 = vmatpush1.bf16.msra.mxu0 0
      %210 = vmatprep.subr.bf16.mxu0 0
      %211 = vmatpush1.bf16.msra.mxu0 0
      %212 = vmatprep.subr.bf16.mxu0 0
      %213 = vmatpush1.bf16.msra.mxu0 0
      %214 = vmatprep.subr.bf16.mxu0 0
      %215 = vmatpush1.bf16.msra.mxu0 0
      %216 = vmatprep.subr.bf16.mxu0 0
      %217 = vmatpush1.bf16.msra.mxu0 0
      %218 = vmatprep.subr.bf16.mxu0 0
      %219 = vmatpush1.bf16.msra.mxu0 0
      %220 = vmatprep.mubr.bf16.mxu0 0
      %221 = vmatmul.mubr.bf16.gmra.mrb[0].mxu0 %v134
      %v222 = vpop.f32.mrb[0].mxu0
      %v223 = vadd.f32 %v105, %v222
      %v224 = vpop.f32.mrb[0].mxu0
      %v225 = vpop.f32.mrb[0].mxu0
      %v226 = vadd.f32 %v110, %v225
      %v227 = vpop.f32.mrb[0].mxu0
      %228 = vmatprep.mubr.bf16.mxu0 0
      %229 = vmatmul.mubr.bf16.gmra.mrb[0].mxu0 %v137
      %v230 = vpop.f32.mrb[0].mxu0
      %v231 = vadd.f32 %v115, %v230
      %v232 = vpop.f32.mrb[0].mxu0
      %v233 = vpop.f32.mrb[0].mxu0
      %v234 = vadd.f32 %v120, %v233
      %v235 = vpop.f32.mrb[0].mxu0
      %236 = vdwg.mxu0
      %237 = vmatprep.subr.bf16.mxu0 0
      %238 = vmatpush1.bf16.msra.mxu0 %v100
      %239 = vmatprep.subr.bf16.mxu0 0
      %240 = vmatpush1.bf16.msra.mxu0 0
      %241 = vmatprep.subr.bf16.mxu0 0
      %242 = vmatpush1.bf16.msra.mxu0 0
      %243 = vmatprep.subr.bf16.mxu0 0
      %244 = vmatpush1.bf16.msra.mxu0 0
      %245 = vmatprep.subr.bf16.mxu0 0
      %246 = vmatpush1.bf16.msra.mxu0 0
      %247 = vmatprep.subr.bf16.mxu0 0
      %248 = vmatpush1.bf16.msra.mxu0 0
      %249 = vmatprep.subr.bf16.mxu0 0
      %250 = vmatpush1.bf16.msra.mxu0 0
      %251 = vmatprep.subr.bf16.mxu0 0
      %252 = vmatpush1.bf16.msra.mxu0 0
      %253 = vmatprep.subr.bf16.mxu0 0
      %254 = vmatpush1.bf16.msra.mxu0 0
      %255 = vmatprep.subr.bf16.mxu0 0
      %256 = vmatpush1.bf16.msra.mxu0 0
      %257 = vmatprep.subr.bf16.mxu0 0
      %258 = vmatpush1.bf16.msra.mxu0 0
      %259 = vmatprep.subr.bf16.mxu0 0
      %260 = vmatpush1.bf16.msra.mxu0 0
      %261 = vmatprep.subr.bf16.mxu0 0
      %262 = vmatpush1.bf16.msra.mxu0 0
      %263 = vmatprep.subr.bf16.mxu0 0
      %264 = vmatpush1.bf16.msra.mxu0 0
      %265 = vmatprep.subr.bf16.mxu0 0
      %266 = vmatpush1.bf16.msra.mxu0 0
      %267 = vmatprep.subr.bf16.mxu0 0
      %268 = vmatpush1.bf16.msra.mxu0 0
      %269 = vmatprep.mubr.bf16.mxu0 0
      %270 = vmatmul.mubr.bf16.gmra.mrb[0].mxu0 %v134
      %v271 = vpop.f32.mrb[0].mxu0
      %v272 = vadd.f32 %v105, %v271
      %v273 = vpop.f32.mrb[0].mxu0
      %v274 = vpop.f32.mrb[0].mxu0
      %v275 = vadd.f32 %v110, %v274
      %v276 = vpop.f32.mrb[0].mxu0
      %277 = vmatprep.mubr.bf16.mxu0 0
      %278 = vmatmul.mubr.bf16.gmra.mrb[0].mxu0 %v137
      %v279 = vpop.f32.mrb[0].mxu0
      %v280 = vadd.f32 %v115, %v279
      %v281 = vpop.f32.mrb[0].mxu0
      %v282 = vpop.f32.mrb[0].mxu0
      %v283 = vadd.f32 %v120, %v282
      %v284 = vpop.f32.mrb[0].mxu0
      %285 = vdwg.mxu0
      %286 = vmatprep.subr.bf16.mxu0 0
      %287 = vmatpush1.bf16.msra.mxu0 %v101
      %288 = vmatprep.subr.bf16.mxu0 0
      %289 = vmatpush1.bf16.msra.mxu0 0
      %290 = vmatprep.subr.bf16.mxu0 0
      %291 = vmatpush1.bf16.msra.mxu0 0
      %292 = vmatprep.subr.bf16.mxu0 0
      %293 = vmatpush1.bf16.msra.mxu0 0
      %294 = vmatprep.subr.bf16.mxu0 0
      %295 = vmatpush1.bf16.msra.mxu0 0
      %296 = vmatprep.subr.bf16.mxu0 0
      %297 = vmatpush1.bf16.msra.mxu0 0
      %298 = vmatprep.subr.bf16.mxu0 0
      %299 = vmatpush1.bf16.msra.mxu0 0
      %300 = vmatprep.subr.bf16.mxu0 0
      %301 = vmatpush1.bf16.msra.mxu0 0
      %302 = vmatprep.subr.bf16.mxu0 0
      %303 = vmatpush1.bf16.msra.mxu0 0
      %304 = vmatprep.subr.bf16.mxu0 0
      %305 = vmatpush1.bf16.msra.mxu0 0
      %306 = vmatprep.subr.bf16.mxu0 0
      %307 = vmatpush1.bf16.msra.mxu0 0
      %308 = vmatprep.subr.bf16.mxu0 0
      %309 = vmatpush1.bf16.msra.mxu0 0
      %310 = vmatprep.subr.bf16.mxu0 0
      %311 = vmatpush1.bf16.msra.mxu0 0
      %312 = vmatprep.subr.bf16.mxu0 0
      %313 = vmatpush1.bf16.msra.mxu0 0
      %314 = vmatprep.subr.bf16.mxu0 0
      %315 = vmatpush1.bf16.msra.mxu0 0
      %316 = vmatprep.subr.bf16.mxu0 0
      %317 = vmatpush1.bf16.msra.mxu0 0
      %318 = vmatprep.mubr.bf16.mxu0 0
      %319 = vmatmul.mubr.bf16.gmra.mrb[0].mxu0 %v134
      %v320 = vpop.f32.mrb[0].mxu0
      %v321 = vadd.f32 %v105, %v320
      %v322 = vpop.f32.mrb[0].mxu0
      %v323 = vpop.f32.mrb[0].mxu0
      %v324 = vadd.f32 %v110, %v323
      %v325 = vpop.f32.mrb[0].mxu0
      %326 = vmatprep.mubr.bf16.mxu0 0
      %327 = vmatmul.mubr.bf16.gmra.mrb[0].mxu0 %v137
      %v328 = vpop.f32.mrb[0].mxu0
      %v329 = vadd.f32 %v115, %v328
      %v330 = vpop.f32.mrb[0].mxu0
      %v331 = vpop.f32.mrb[0].mxu0
      %v332 = vadd.f32 %v120, %v331
      %v333 = vpop.f32.mrb[0].mxu0
      %334 = vdwg.mxu0
      %vm335 = vcmp.ge.f32.partialorder %v174, 0.0
      %vm336 = vcmp.ge.f32.partialorder %v177, 0.0
      %vm337 = vcmp.ge.f32.partialorder %v182, 0.0
      %vm338 = vcmp.ge.f32.partialorder %v185, 0.0
      %vm339 = vcmp.ge.f32.partialorder %v223, 0.0
      %vm340 = vcmp.ge.f32.partialorder %v226, 0.0
      %vm341 = vcmp.ge.f32.partialorder %v231, 0.0
      %vm342 = vcmp.ge.f32.partialorder %v234, 0.0
      %vm343 = vcmp.ge.f32.partialorder %v272, 0.0
      %vm344 = vcmp.ge.f32.partialorder %v275, 0.0
      %vm345 = vcmp.ge.f32.partialorder %v280, 0.0
      %vm346 = vcmp.ge.f32.partialorder %v283, 0.0
      %vm347 = vcmp.ge.f32.partialorder %v321, 0.0
      %vm348 = vcmp.ge.f32.partialorder %v324, 0.0
      %vm349 = vcmp.ge.f32.partialorder %v329, 0.0
      %vm350 = vcmp.ge.f32.partialorder %v332, 0.0
      %v351 = vstv %s53
      %v352 = vmul.f32 %v351, %v174
      %v353 = vmul.f32 %v351, %v177
      %v354 = vmul.f32 %v351, %v182
      %v355 = vmul.f32 %v351, %v185
      %v356 = vmul.f32 %v351, %v223
      %v357 = vmul.f32 %v351, %v226
      %v358 = vmul.f32 %v351, %v231
      %v359 = vmul.f32 %v351, %v234
      %v360 = vmul.f32 %v351, %v272
      %v361 = vmul.f32 %v351, %v275
      %v362 = vmul.f32 %v351, %v280
      %v363 = vmul.f32 %v351, %v283
      %v364 = vmul.f32 %v351, %v321
      %v365 = vmul.f32 %v351, %v324
      %v366 = vmul.f32 %v351, %v329
      %v367 = vmul.f32 %v351, %v332
      %v368 = vsel %vm335, %v174, %v352
      %v369 = vsel %vm336, %v177, %v353
      %v370 = vsel %vm337, %v182, %v354
      %v371 = vsel %vm338, %v185, %v355
      %v372 = vsel %vm339, %v223, %v356
      %v373 = vsel %vm340, %v226, %v357
      %v374 = vsel %vm341, %v231, %v358
      %v375 = vsel %vm342, %v234, %v359
      %v376 = vsel %vm343, %v272, %v360
      %v377 = vsel %vm344, %v275, %v361
      %v378 = vsel %vm345, %v280, %v362
      %v379 = vsel %vm346, %v283, %v363
      %v380 = vsel %vm347, %v321, %v364
      %v381 = vsel %vm348, %v324, %v365
      %v382 = vsel %vm349, %v329, %v366
      %v383 = vsel %vm350, %v332, %v367
      %v384 = vsel %vm132, %v368, 0.0
      %v385 = vsel %vm132, %v372, 0.0
      %v386 = vadd.f32 %v384, %v385
      %v387 = vsel %vm132, %v376, 0.0
      %v388 = vadd.f32 %v386, %v387
      %v389 = vsel %vm132, %v380, 0.0
      %v390 = vadd.f32 %v388, %v389
      %v391 = vsel %vm132, %v369, 0.0
      %v392 = vsel %vm132, %v373, 0.0
      %v393 = vadd.f32 %v391, %v392
      %v394 = vsel %vm132, %v377, 0.0
      %v395 = vadd.f32 %v393, %v394
      %v396 = vsel %vm132, %v381, 0.0
      %v397 = vadd.f32 %v395, %v396
      %v398 = vsel %vm132, %v370, 0.0
      %v399 = vsel %vm132, %v374, 0.0
      %v400 = vadd.f32 %v398, %v399
      %v401 = vsel %vm132, %v378, 0.0
      %v402 = vadd.f32 %v400, %v401
      %v403 = vsel %vm132, %v382, 0.0
      %v404 = vadd.f32 %v402, %v403
      %v405 = vsel %vm132, %v371, 0.0
      %v406 = vsel %vm132, %v375, 0.0
      %v407 = vadd.f32 %v405, %v406
      %v408 = vsel %vm132, %v379, 0.0
      %v409 = vadd.f32 %v407, %v408
      %v410 = vsel %vm132, %v383, 0.0
      %v411 = vadd.f32 %v409, %v410
      %v412 = vmul.f32 %v390, 0.25
      %v413 = vmul.f32 %v397, 0.25
      %v414 = vmul.f32 %v404, 0.25
      %v415 = vmul.f32 %v411, 0.25
      %v416 = vpack.c.bf16 %v413, %v412
      %v417 = vpack.c.bf16 %v415, %v414
      %419 = vset.pattern.permute.xlu0 0
      %420 = vperm.xlu0 %419, %v72
      %v421 = vpop.permute.xlu0 %420
      %424 = vset.pattern.permute.xlu0 0
      %425 = vperm.xlu0 %424, %v73
      %v426 = vpop.permute.xlu0 %425
      %429 = vset.pattern.permute.xlu0 0
      %430 = vperm.xlu0 %429, %v74
      %v431 = vpop.permute.xlu0 %430
      %434 = vset.pattern.permute.xlu0 0
      %435 = vperm.xlu0 %434, %v75
      %v436 = vpop.permute.xlu0 %435
      %v442 = vunpack.c.l.b16 %v62
      %v443 = vunpack.c.l.b16 %v63
      %v444 = vunpack.c.l.b16 %v64
      %v445 = vunpack.c.l.b16 %v65
      %v446 = vpack.c.b16 %v443, %v442
      %v447 = vpack.c.b16 %v445, %v444
      %vm448 = vcmask 261120
      %v450 = vsel %vm448, %v446, 0
      %v453 = vsel %vm448, %v447, 0
      %455 = vmatprep.subr.bf16.mxu0 0
      %456 = vmatpush1.bf16.msra.mxu0 %v416
      %457 = vmatprep.subr.bf16.mxu0 0
      %458 = vmatpush1.bf16.msra.mxu0 %v417
      %459 = vmatprep.subr.bf16.mxu0 0
      %460 = vmatpush1.bf16.msra.mxu0 0
      %461 = vmatprep.subr.bf16.mxu0 0
      %462 = vmatpush1.bf16.msra.mxu0 0
      %463 = vmatprep.subr.bf16.mxu0 0
      %464 = vmatpush1.bf16.msra.mxu0 0
      %465 = vmatprep.subr.bf16.mxu0 0
      %466 = vmatpush1.bf16.msra.mxu0 0
      %467 = vmatprep.subr.bf16.mxu0 0
      %468 = vmatpush1.bf16.msra.mxu0 0
      %469 = vmatprep.subr.bf16.mxu0 0
      %470 = vmatpush1.bf16.msra.mxu0 0
      %471 = vmatprep.subr.bf16.mxu0 0
      %472 = vmatpush1.bf16.msra.mxu0 0
      %473 = vmatprep.subr.bf16.mxu0 0
      %474 = vmatpush1.bf16.msra.mxu0 0
      %475 = vmatprep.subr.bf16.mxu0 0
      %476 = vmatpush1.bf16.msra.mxu0 0
      %477 = vmatprep.subr.bf16.mxu0 0
      %478 = vmatpush1.bf16.msra.mxu0 0
      %479 = vmatprep.subr.bf16.mxu0 0
      %480 = vmatpush1.bf16.msra.mxu0 0
      %481 = vmatprep.subr.bf16.mxu0 0
      %482 = vmatpush1.bf16.msra.mxu0 0
      %483 = vmatprep.subr.bf16.mxu0 0
      %484 = vmatpush1.bf16.msra.mxu0 0
      %485 = vmatprep.subr.bf16.mxu0 0
      %486 = vmatpush1.bf16.msra.mxu0 0
      %487 = vmatprep.mubr.bf16.mxu0 0
      %488 = vmatmul.mubr.bf16.gmra.mrb[0].mxu0 %v450
      %v489 = vpop.f32.mrb[0].mxu0
      %v490 = vadd.f32 %v421, %v489
      %v491 = vpop.f32.mrb[0].mxu0
      %v492 = vpop.f32.mrb[0].mxu0
      %v493 = vadd.f32 %v426, %v492
      %v494 = vpop.f32.mrb[0].mxu0
      %495 = vmatprep.mubr.bf16.mxu0 0
      %496 = vmatmul.mubr.bf16.gmra.mrb[0].mxu0 %v453
      %v497 = vpop.f32.mrb[0].mxu0
      %v498 = vadd.f32 %v431, %v497
      %v499 = vpop.f32.mrb[0].mxu0
      %v500 = vpop.f32.mrb[0].mxu0
      %v501 = vadd.f32 %v436, %v500
      %v502 = vpop.f32.mrb[0].mxu0
      %503 = vdwg.mxu0
      %vm504 = vcmp.ge.f32.partialorder %v490, 0.0
      %vm505 = vcmp.ge.f32.partialorder %v493, 0.0
      %vm506 = vcmp.ge.f32.partialorder %v498, 0.0
      %vm507 = vcmp.ge.f32.partialorder %v501, 0.0
      %v508 = vstv %s54
      %v509 = vmul.f32 %v508, %v490
      %v510 = vmul.f32 %v508, %v493
      %v511 = vmul.f32 %v508, %v498
      %v512 = vmul.f32 %v508, %v501
      %v513 = vsel %vm504, %v490, %v509
      %v514 = vsel %vm505, %v493, %v510
      %v515 = vsel %vm506, %v498, %v511
      %v516 = vsel %vm507, %v501, %v512
      %v517 = vpack.c.bf16 %v514, %v513
      %v518 = vpack.c.bf16 %v516, %v515
      %520 = vset.pattern.permute.xlu0 0
      %521 = vperm.xlu0 %520, %v76
      %v522 = vpop.permute.xlu0 %521
      %525 = vset.pattern.permute.xlu0 0
      %526 = vperm.xlu0 %525, %v77
      %v527 = vpop.permute.xlu0 %526
      %v531 = vunpack.c.l.b16 %v66
      %v532 = vunpack.c.l.b16 %v67
      %v533 = vpack.c.b16 %v532, %v531
      %v535 = vsel %vm448, %v533, 0
      %537 = vmatprep.subr.bf16.mxu0 0
      %538 = vmatpush1.bf16.msra.mxu0 %v517
      %539 = vmatprep.subr.bf16.mxu0 0
      %540 = vmatpush1.bf16.msra.mxu0 %v518
      %541 = vmatprep.subr.bf16.mxu0 0
      %542 = vmatpush1.bf16.msra.mxu0 0
      %543 = vmatprep.subr.bf16.mxu0 0
      %544 = vmatpush1.bf16.msra.mxu0 0
      %545 = vmatprep.subr.bf16.mxu0 0
      %546 = vmatpush1.bf16.msra.mxu0 0
      %547 = vmatprep.subr.bf16.mxu0 0
      %548 = vmatpush1.bf16.msra.mxu0 0
      %549 = vmatprep.subr.bf16.mxu0 0
      %550 = vmatpush1.bf16.msra.mxu0 0
      %551 = vmatprep.subr.bf16.mxu0 0
      %552 = vmatpush1.bf16.msra.mxu0 0
      %553 = vmatprep.subr.bf16.mxu0 0
      %554 = vmatpush1.bf16.msra.mxu0 0
      %555 = vmatprep.subr.bf16.mxu0 0
      %556 = vmatpush1.bf16.msra.mxu0 0
      %557 = vmatprep.subr.bf16.mxu0 0
      %558 = vmatpush1.bf16.msra.mxu0 0
      %559 = vmatprep.subr.bf16.mxu0 0
      %560 = vmatpush1.bf16.msra.mxu0 0
      %561 = vmatprep.subr.bf16.mxu0 0
      %562 = vmatpush1.bf16.msra.mxu0 0
      %563 = vmatprep.subr.bf16.mxu0 0
      %564 = vmatpush1.bf16.msra.mxu0 0
      %565 = vmatprep.subr.bf16.mxu0 0
      %566 = vmatpush1.bf16.msra.mxu0 0
      %567 = vmatprep.subr.bf16.mxu0 0
      %568 = vmatpush1.bf16.msra.mxu0 0
      %569 = vmatprep.mubr.bf16.mxu0 0
      %570 = vmatmul.mubr.bf16.gmra.mrb[0].mxu0 %v535
      %v571 = vpop.f32.mrb[0].mxu0
      %v572 = vadd.f32 %v522, %v571
      %v573 = vpop.f32.mrb[0].mxu0
      %v574 = vpop.f32.mrb[0].mxu0
      %v575 = vadd.f32 %v527, %v574
      %v576 = vpop.f32.mrb[0].mxu0
      %577 = vdwg.mxu0
      %v578 = vpack.c.bf16 %v369, %v368
      %v579 = vpack.c.bf16 %v371, %v370
      %v580 = vpack.c.bf16 %v373, %v372
      %v581 = vpack.c.bf16 %v375, %v374
      %v582 = vpack.c.bf16 %v377, %v376
      %v583 = vpack.c.bf16 %v379, %v378
      %v584 = vpack.c.bf16 %v381, %v380
      %v585 = vpack.c.bf16 %v383, %v382
      %v588 = vunpack.c.l.b16 %v60
      %v589 = vunpack.c.l.b16 %v61
      %v590 = vpack.c.b16 %v589, %v588
      %v592 = vsel %vm448, %v590, 0
      %594 = vmatprep.subr.bf16.mxu0 0
      %595 = vmatpush1.bf16.msra.mxu0 %v578
      %596 = vmatprep.subr.bf16.mxu0 0
      %597 = vmatpush1.bf16.msra.mxu0 %v579
      %598 = vmatprep.subr.bf16.mxu0 0
      %599 = vmatpush1.bf16.msra.mxu0 0
      %600 = vmatprep.subr.bf16.mxu0 0
      %601 = vmatpush1.bf16.msra.mxu0 0
      %602 = vmatprep.subr.bf16.mxu0 0
      %603 = vmatpush1.bf16.msra.mxu0 0
      %604 = vmatprep.subr.bf16.mxu0 0
      %605 = vmatpush1.bf16.msra.mxu0 0
      %606 = vmatprep.subr.bf16.mxu0 0
      %607 = vmatpush1.bf16.msra.mxu0 0
      %608 = vmatprep.subr.bf16.mxu0 0
      %609 = vmatpush1.bf16.msra.mxu0 0
      %610 = vmatprep.subr.bf16.mxu0 0
      %611 = vmatpush1.bf16.msra.mxu0 0
      %612 = vmatprep.subr.bf16.mxu0 0
      %613 = vmatpush1.bf16.msra.mxu0 0
      %614 = vmatprep.subr.bf16.mxu0 0
      %615 = vmatpush1.bf16.msra.mxu0 0
      %616 = vmatprep.subr.bf16.mxu0 0
      %617 = vmatpush1.bf16.msra.mxu0 0
      %618 = vmatprep.subr.bf16.mxu0 0
      %619 = vmatpush1.bf16.msra.mxu0 0
      %620 = vmatprep.subr.bf16.mxu0 0
      %621 = vmatpush1.bf16.msra.mxu0 0
      %622 = vmatprep.subr.bf16.mxu0 0
      %623 = vmatpush1.bf16.msra.mxu0 0
      %624 = vmatprep.subr.bf16.mxu0 0
      %625 = vmatpush1.bf16.msra.mxu0 0
      %626 = vmatprep.mubr.bf16.mxu0 0
      %627 = vmatmul.mubr.bf16.gmra.mrb[0].mxu0 %v592
      %v628 = vpop.f32.mrb[0].mxu0
      %v629 = vadd.f32 %v572, %v628
      %v630 = vpop.f32.mrb[0].mxu0
      %v631 = vpop.f32.mrb[0].mxu0
      %v632 = vadd.f32 %v575, %v631
      %v633 = vpop.f32.mrb[0].mxu0
      %634 = vdwg.mxu0
      %635 = vmatprep.subr.bf16.mxu0 0
      %636 = vmatpush1.bf16.msra.mxu0 %v580
      %637 = vmatprep.subr.bf16.mxu0 0
      %638 = vmatpush1.bf16.msra.mxu0 %v581
      %639 = vmatprep.subr.bf16.mxu0 0
      %640 = vmatpush1.bf16.msra.mxu0 0
      %641 = vmatprep.subr.bf16.mxu0 0
      %642 = vmatpush1.bf16.msra.mxu0 0
      %643 = vmatprep.subr.bf16.mxu0 0
      %644 = vmatpush1.bf16.msra.mxu0 0
      %645 = vmatprep.subr.bf16.mxu0 0
      %646 = vmatpush1.bf16.msra.mxu0 0
      %647 = vmatprep.subr.bf16.mxu0 0
      %648 = vmatpush1.bf16.msra.mxu0 0
      %649 = vmatprep.subr.bf16.mxu0 0
      %650 = vmatpush1.bf16.msra.mxu0 0
      %651 = vmatprep.subr.bf16.mxu0 0
      %652 = vmatpush1.bf16.msra.mxu0 0
      %653 = vmatprep.subr.bf16.mxu0 0
      %654 = vmatpush1.bf16.msra.mxu0 0
      %655 = vmatprep.subr.bf16.mxu0 0
      %656 = vmatpush1.bf16.msra.mxu0 0
      %657 = vmatprep.subr.bf16.mxu0 0
      %658 = vmatpush1.bf16.msra.mxu0 0
      %659 = vmatprep.subr.bf16.mxu0 0
      %660 = vmatpush1.bf16.msra.mxu0 0
      %661 = vmatprep.subr.bf16.mxu0 0
      %662 = vmatpush1.bf16.msra.mxu0 0
      %663 = vmatprep.subr.bf16.mxu0 0
      %664 = vmatpush1.bf16.msra.mxu0 0
      %665 = vmatprep.subr.bf16.mxu0 0
      %666 = vmatpush1.bf16.msra.mxu0 0
      %667 = vmatprep.mubr.bf16.mxu0 0
      %668 = vmatmul.mubr.bf16.gmra.mrb[0].mxu0 %v592
      %v669 = vpop.f32.mrb[0].mxu0
      %v670 = vadd.f32 %v572, %v669
      %v671 = vpop.f32.mrb[0].mxu0
      %v672 = vpop.f32.mrb[0].mxu0
      %v673 = vadd.f32 %v575, %v672
      %v674 = vpop.f32.mrb[0].mxu0
      %675 = vdwg.mxu0
      %676 = vmatprep.subr.bf16.mxu0 0
      %677 = vmatpush1.bf16.msra.mxu0 %v582
      %678 = vmatprep.subr.bf16.mxu0 0
      %679 = vmatpush1.bf16.msra.mxu0 %v583
      %680 = vmatprep.subr.bf16.mxu0 0
      %681 = vmatpush1.bf16.msra.mxu0 0
      %682 = vmatprep.subr.bf16.mxu0 0
      %683 = vmatpush1.bf16.msra.mxu0 0
      %684 = vmatprep.subr.bf16.mxu0 0
      %685 = vmatpush1.bf16.msra.mxu0 0
      %686 = vmatprep.subr.bf16.mxu0 0
      %687 = vmatpush1.bf16.msra.mxu0 0
      %688 = vmatprep.subr.bf16.mxu0 0
      %689 = vmatpush1.bf16.msra.mxu0 0
      %690 = vmatprep.subr.bf16.mxu0 0
      %691 = vmatpush1.bf16.msra.mxu0 0
      %692 = vmatprep.subr.bf16.mxu0 0
      %693 = vmatpush1.bf16.msra.mxu0 0
      %694 = vmatprep.subr.bf16.mxu0 0
      %695 = vmatpush1.bf16.msra.mxu0 0
      %696 = vmatprep.subr.bf16.mxu0 0
      %697 = vmatpush1.bf16.msra.mxu0 0
      %698 = vmatprep.subr.bf16.mxu0 0
      %699 = vmatpush1.bf16.msra.mxu0 0
      %700 = vmatprep.subr.bf16.mxu0 0
      %701 = vmatpush1.bf16.msra.mxu0 0
      %702 = vmatprep.subr.bf16.mxu0 0
      %703 = vmatpush1.bf16.msra.mxu0 0
      %704 = vmatprep.subr.bf16.mxu0 0
      %705 = vmatpush1.bf16.msra.mxu0 0
      %706 = vmatprep.subr.bf16.mxu0 0
      %707 = vmatpush1.bf16.msra.mxu0 0
      %708 = vmatprep.mubr.bf16.mxu0 0
      %709 = vmatmul.mubr.bf16.gmra.mrb[0].mxu0 %v592
      %v710 = vpop.f32.mrb[0].mxu0
      %v711 = vadd.f32 %v572, %v710
      %v712 = vpop.f32.mrb[0].mxu0
      %v713 = vpop.f32.mrb[0].mxu0
      %v714 = vadd.f32 %v575, %v713
      %v715 = vpop.f32.mrb[0].mxu0
      %716 = vdwg.mxu0
      %717 = vmatprep.subr.bf16.mxu0 0
      %718 = vmatpush1.bf16.msra.mxu0 %v584
      %719 = vmatprep.subr.bf16.mxu0 0
      %720 = vmatpush1.bf16.msra.mxu0 %v585
      %721 = vmatprep.subr.bf16.mxu0 0
      %722 = vmatpush1.bf16.msra.mxu0 0
      %723 = vmatprep.subr.bf16.mxu0 0
      %724 = vmatpush1.bf16.msra.mxu0 0
      %725 = vmatprep.subr.bf16.mxu0 0
      %726 = vmatpush1.bf16.msra.mxu0 0
      %727 = vmatprep.subr.bf16.mxu0 0
      %728 = vmatpush1.bf16.msra.mxu0 0
      %729 = vmatprep.subr.bf16.mxu0 0
      %730 = vmatpush1.bf16.msra.mxu0 0
      %731 = vmatprep.subr.bf16.mxu0 0
      %732 = vmatpush1.bf16.msra.mxu0 0
      %733 = vmatprep.subr.bf16.mxu0 0
      %734 = vmatpush1.bf16.msra.mxu0 0
      %735 = vmatprep.subr.bf16.mxu0 0
      %736 = vmatpush1.bf16.msra.mxu0 0
      %737 = vmatprep.subr.bf16.mxu0 0
      %738 = vmatpush1.bf16.msra.mxu0 0
      %739 = vmatprep.subr.bf16.mxu0 0
      %740 = vmatpush1.bf16.msra.mxu0 0
      %741 = vmatprep.subr.bf16.mxu0 0
      %742 = vmatpush1.bf16.msra.mxu0 0
      %743 = vmatprep.subr.bf16.mxu0 0
      %744 = vmatpush1.bf16.msra.mxu0 0
      %745 = vmatprep.subr.bf16.mxu0 0
      %746 = vmatpush1.bf16.msra.mxu0 0
      %747 = vmatprep.subr.bf16.mxu0 0
      %748 = vmatpush1.bf16.msra.mxu0 0
      %749 = vmatprep.mubr.bf16.mxu0 0
      %750 = vmatmul.mubr.bf16.gmra.mrb[0].mxu0 %v592
      %v751 = vpop.f32.mrb[0].mxu0
      %v752 = vadd.f32 %v572, %v751
      %v753 = vpop.f32.mrb[0].mxu0
      %v754 = vpop.f32.mrb[0].mxu0
      %v755 = vadd.f32 %v575, %v754
      %v756 = vpop.f32.mrb[0].mxu0
      %757 = vdwg.mxu0
      %vm758 = vcmp.ge.f32.partialorder %v629, 0.0
      %vm759 = vcmp.ge.f32.partialorder %v632, 0.0
      %vm760 = vcmp.ge.f32.partialorder %v670, 0.0
      %vm761 = vcmp.ge.f32.partialorder %v673, 0.0
      %vm762 = vcmp.ge.f32.partialorder %v711, 0.0
      %vm763 = vcmp.ge.f32.partialorder %v714, 0.0
      %vm764 = vcmp.ge.f32.partialorder %v752, 0.0
      %vm765 = vcmp.ge.f32.partialorder %v755, 0.0
      %v766 = vstv %s55
      %v767 = vmul.f32 %v766, %v629
      %v768 = vmul.f32 %v766, %v632
      %v769 = vmul.f32 %v766, %v670
      %v770 = vmul.f32 %v766, %v673
      %v771 = vmul.f32 %v766, %v711
      %v772 = vmul.f32 %v766, %v714
      %v773 = vmul.f32 %v766, %v752
      %v774 = vmul.f32 %v766, %v755
      %v775 = vsel %vm758, %v629, %v767
      %v776 = vsel %vm759, %v632, %v768
      %v777 = vsel %vm760, %v670, %v769
      %v778 = vsel %vm761, %v673, %v770
      %v779 = vsel %vm762, %v711, %v771
      %v780 = vsel %vm763, %v714, %v772
      %v781 = vsel %vm764, %v752, %v773
      %v782 = vsel %vm765, %v755, %v774
      %v783 = vsel %vm132, %v775, 0.0
      %784 = vadd.xlane.f32.xlu0 %v783
      %v785 = vpop.xlane.xlu0 %784
      %v786 = vsel %vm132, %v776, 0.0
      %787 = vadd.xlane.f32.xlu0 %v786
      %v788 = vpop.xlane.xlu0 %787
      %v789 = vsel %vm132, %v777, 0.0
      %790 = vadd.xlane.f32.xlu0 %v789
      %v791 = vpop.xlane.xlu0 %790
      %v792 = vsel %vm132, %v778, 0.0
      %793 = vadd.xlane.f32.xlu0 %v792
      %v794 = vpop.xlane.xlu0 %793
      %v795 = vsel %vm132, %v779, 0.0
      %796 = vadd.xlane.f32.xlu0 %v795
      %v797 = vpop.xlane.xlu0 %796
      %v798 = vsel %vm132, %v780, 0.0
      %799 = vadd.xlane.f32.xlu0 %v798
      %v800 = vpop.xlane.xlu0 %799
      %v801 = vsel %vm132, %v781, 0.0
      %802 = vadd.xlane.f32.xlu0 %v801
      %v803 = vpop.xlane.xlu0 %802
      %v804 = vsel %vm132, %v782, 0.0
      %805 = vadd.xlane.f32.xlu0 %v804
      %v806 = vpop.xlane.xlu0 %805
      %v807 = vadd.f32 %v785, %v788
      %v808 = vrot.slane %v807, 4
      %v809 = vadd.f32 %v807, %v808
      %v810 = vrot.slane %v809, 2
      %v811 = vadd.f32 %v809, %v810
      %v812 = vrot.slane %v811, 1
      %v813 = vadd.f32 %v811, %v812
      %v814 = vadd.f32 %v791, %v794
      %v815 = vrot.slane %v814, 4
      %v816 = vadd.f32 %v814, %v815
      %v817 = vrot.slane %v816, 2
      %v818 = vadd.f32 %v816, %v817
      %v819 = vrot.slane %v818, 1
      %v820 = vadd.f32 %v818, %v819
      %v821 = vadd.f32 %v797, %v800
      %v822 = vrot.slane %v821, 4
      %v823 = vadd.f32 %v821, %v822
      %v824 = vrot.slane %v823, 2
      %v825 = vadd.f32 %v823, %v824
      %v826 = vrot.slane %v825, 1
      %v827 = vadd.f32 %v825, %v826
      %v828 = vadd.f32 %v803, %v806
      %v829 = vrot.slane %v828, 4
      %v830 = vadd.f32 %v828, %v829
      %v831 = vrot.slane %v830, 2
      %v832 = vadd.f32 %v830, %v831
      %v833 = vrot.slane %v832, 1
      %v834 = vadd.f32 %v832, %v833
      %v835 = vmul.f32 %v775, %v775
      %v836 = vmul.f32 %v776, %v776
      %v837 = vmul.f32 %v777, %v777
      %v838 = vmul.f32 %v778, %v778
      %v839 = vmul.f32 %v779, %v779
      %v840 = vmul.f32 %v780, %v780
      %v841 = vmul.f32 %v781, %v781
      %v842 = vmul.f32 %v782, %v782
      %v843 = vsel %vm132, %v835, 0.0
      %844 = vadd.xlane.f32.xlu0 %v843
      %v845 = vpop.xlane.xlu0 %844
      %v846 = vsel %vm132, %v836, 0.0
      %847 = vadd.xlane.f32.xlu0 %v846
      %v848 = vpop.xlane.xlu0 %847
      %v849 = vsel %vm132, %v837, 0.0
      %850 = vadd.xlane.f32.xlu0 %v849
      %v851 = vpop.xlane.xlu0 %850
      %v852 = vsel %vm132, %v838, 0.0
      %853 = vadd.xlane.f32.xlu0 %v852
      %v854 = vpop.xlane.xlu0 %853
      %v855 = vsel %vm132, %v839, 0.0
      %856 = vadd.xlane.f32.xlu0 %v855
      %v857 = vpop.xlane.xlu0 %856
      %v858 = vsel %vm132, %v840, 0.0
      %859 = vadd.xlane.f32.xlu0 %v858
      %v860 = vpop.xlane.xlu0 %859
      %v861 = vsel %vm132, %v841, 0.0
      %862 = vadd.xlane.f32.xlu0 %v861
      %v863 = vpop.xlane.xlu0 %862
      %v864 = vsel %vm132, %v842, 0.0
      %865 = vadd.xlane.f32.xlu0 %v864
      %v866 = vpop.xlane.xlu0 %865
      %v867 = vadd.f32 %v845, %v848
      %v868 = vrot.slane %v867, 4
      %v869 = vadd.f32 %v867, %v868
      %v870 = vrot.slane %v869, 2
      %v871 = vadd.f32 %v869, %v870
      %v872 = vrot.slane %v871, 1
      %v873 = vadd.f32 %v871, %v872
      %v874 = vadd.f32 %v851, %v854
      %v875 = vrot.slane %v874, 4
      %v876 = vadd.f32 %v874, %v875
      %v877 = vrot.slane %v876, 2
      %v878 = vadd.f32 %v876, %v877
      %v879 = vrot.slane %v878, 1
      %v880 = vadd.f32 %v878, %v879
      %v881 = vadd.f32 %v857, %v860
      %v882 = vrot.slane %v881, 4
      %v883 = vadd.f32 %v881, %v882
      %v884 = vrot.slane %v883, 2
      %v885 = vadd.f32 %v883, %v884
      %v886 = vrot.slane %v885, 1
      %v887 = vadd.f32 %v885, %v886
      %v888 = vadd.f32 %v863, %v866
      %v889 = vrot.slane %v888, 4
      %v890 = vadd.f32 %v888, %v889
      %v891 = vrot.slane %v890, 2
      %v892 = vadd.f32 %v890, %v891
      %v893 = vrot.slane %v892, 1
      %v894 = vadd.f32 %v892, %v893
      %v895 = vmul.f32 %v813, 0.00390625
      %v896 = vmul.f32 %v820, 0.00390625
      %v897 = vmul.f32 %v827, 0.00390625
      %v898 = vmul.f32 %v834, 0.00390625
      %v899 = vmul.f32 %v873, 0.00390625
      %v900 = vmul.f32 %v880, 0.00390625
      %v901 = vmul.f32 %v887, 0.00390625
      %v902 = vmul.f32 %v894, 0.00390625
      %v903 = vmul.f32 %v895, %v895
      %v904 = vmul.f32 %v896, %v896
      %v905 = vmul.f32 %v897, %v897
      %v906 = vmul.f32 %v898, %v898
      %v907 = vsub.f32 %v899, %v903
      %v908 = vsub.f32 %v900, %v904
      %v909 = vsub.f32 %v901, %v905
      %v910 = vsub.f32 %v902, %v906
      %v911 = vadd.f32 %v907, 1e-05
      %v912 = vadd.f32 %v908, 1e-05
      %v913 = vadd.f32 %v909, 1e-05
      %v914 = vadd.f32 %v910, 1e-05
      %v915 = vrsqrt.pop %v911
      %v916 = vrsqrt.pop %v912
      %v917 = vrsqrt.pop %v913
      %v918 = vrsqrt.pop %v914
      %v919 = vmul.f32 %v915, %v78
      %v920 = vmul.f32 %v915, %v79
      %v921 = vmul.f32 %v916, %v78
      %v922 = vmul.f32 %v916, %v79
      %v923 = vmul.f32 %v917, %v78
      %v924 = vmul.f32 %v917, %v79
      %v925 = vmul.f32 %v918, %v78
      %v926 = vmul.f32 %v918, %v79
      %v927 = vmul.f32 %v895, %v919
      %v928 = vmul.f32 %v895, %v920
      %v929 = vmul.f32 %v896, %v921
      %v930 = vmul.f32 %v896, %v922
      %v931 = vmul.f32 %v897, %v923
      %v932 = vmul.f32 %v897, %v924
      %v933 = vmul.f32 %v898, %v925
      %v934 = vmul.f32 %v898, %v926
      %v935 = vsub.f32 %v80, %v927
      %v936 = vsub.f32 %v81, %v928
      %v937 = vsub.f32 %v80, %v929
      %v938 = vsub.f32 %v81, %v930
      %v939 = vsub.f32 %v80, %v931
      %v940 = vsub.f32 %v81, %v932
      %v941 = vsub.f32 %v80, %v933
      %v942 = vsub.f32 %v81, %v934
      %v943 = vld [vmem:[%s89] sm:$0xff]
      %v944 = vld [vmem:[%s89 + $0x8] sm:$0xff]
      %v945 = vld [vmem:[%s89 + $0x10] sm:$0xff]
      %v946 = vld [vmem:[%s89 + $0x18] sm:$0xff]
      %v947 = vld [vmem:[%s89 + $0x20] sm:$0xff]
      %v948 = vld [vmem:[%s89 + $0x28] sm:$0xff]
      %v949 = vld [vmem:[%s89 + $0x30] sm:$0xff]
      %v950 = vld [vmem:[%s89 + $0x38] sm:$0xff]
      %952 = vset.pattern.permute.xlu0 0
      %953 = vperm.xlu0 %952, %v919
      %v954 = vpop.permute.xlu0 %953
      %957 = vset.pattern.permute.xlu0 0
      %958 = vperm.xlu0 %957, %v920
      %v959 = vpop.permute.xlu0 %958
      %962 = vset.pattern.permute.xlu0 0
      %963 = vperm.xlu0 %962, %v921
      %v964 = vpop.permute.xlu0 %963
      %967 = vset.pattern.permute.xlu0 0
      %968 = vperm.xlu0 %967, %v922
      %v969 = vpop.permute.xlu0 %968
      %972 = vset.pattern.permute.xlu0 0
      %973 = vperm.xlu0 %972, %v923
      %v974 = vpop.permute.xlu0 %973
      %977 = vset.pattern.permute.xlu0 0
      %978 = vperm.xlu0 %977, %v924
      %v979 = vpop.permute.xlu0 %978
      %982 = vset.pattern.permute.xlu0 0
      %983 = vperm.xlu0 %982, %v925
      %v984 = vpop.permute.xlu0 %983
      %987 = vset.pattern.permute.xlu0 0
      %988 = vperm.xlu0 %987, %v926
      %v989 = vpop.permute.xlu0 %988
      %v991 = vmul.f32 %v775, %v954
      %v992 = vmul.f32 %v776, %v959
      %v993 = vmul.f32 %v777, %v964
      %v994 = vmul.f32 %v778, %v969
      %v995 = vmul.f32 %v779, %v974
      %v996 = vmul.f32 %v780, %v979
      %v997 = vmul.f32 %v781, %v984
      %v998 = vmul.f32 %v782, %v989
      %v999 = vadd.f32 %v943, %v991
      %v1000 = vadd.f32 %v944, %v992
      %v1001 = vadd.f32 %v945, %v993
      %v1002 = vadd.f32 %v946, %v994
      %v1003 = vadd.f32 %v947, %v995
      %v1004 = vadd.f32 %v948, %v996
      %v1005 = vadd.f32 %v949, %v997
      %v1006 = vadd.f32 %v950, %v998
      %1008 = vset.pattern.permute.xlu0 0
      %1009 = vperm.xlu0 %1008, %v935
      %v1010 = vpop.permute.xlu0 %1009
      %1013 = vset.pattern.permute.xlu0 0
      %1014 = vperm.xlu0 %1013, %v936
      %v1015 = vpop.permute.xlu0 %1014
      %1018 = vset.pattern.permute.xlu0 0
      %1019 = vperm.xlu0 %1018, %v937
      %v1020 = vpop.permute.xlu0 %1019
      %1023 = vset.pattern.permute.xlu0 0
      %1024 = vperm.xlu0 %1023, %v938
      %v1025 = vpop.permute.xlu0 %1024
      %1028 = vset.pattern.permute.xlu0 0
      %1029 = vperm.xlu0 %1028, %v939
      %v1030 = vpop.permute.xlu0 %1029
      %1033 = vset.pattern.permute.xlu0 0
      %1034 = vperm.xlu0 %1033, %v940
      %v1035 = vpop.permute.xlu0 %1034
      %1038 = vset.pattern.permute.xlu0 0
      %1039 = vperm.xlu0 %1038, %v941
      %v1040 = vpop.permute.xlu0 %1039
      %1043 = vset.pattern.permute.xlu0 0
      %1044 = vperm.xlu0 %1043, %v942
      %v1045 = vpop.permute.xlu0 %1044
      %v1047 = vadd.f32 %v999, %v1010
      %v1048 = vadd.f32 %v1000, %v1015
      %v1049 = vadd.f32 %v1001, %v1020
      %v1050 = vadd.f32 %v1002, %v1025
      %v1051 = vadd.f32 %v1003, %v1030
      %v1052 = vadd.f32 %v1004, %v1035
      %v1053 = vadd.f32 %v1005, %v1040
      %v1054 = vadd.f32 %v1006, %v1045
      %s1055 = scalar_lea.vmem [#allocation5], %s88
      %1056 = vst.msk [vmem:[%s1055] sm:$0xff] %vm132, %v1047
      %1057 = vst.msk [vmem:[%s1055 + $0x8] sm:$0xff] %vm132, %v1048
      %1058 = vst.msk [vmem:[%s1055 + $0x10] sm:$0xff] %vm132, %v1049
      %1059 = vst.msk [vmem:[%s1055 + $0x18] sm:$0xff] %vm132, %v1050
      %1060 = vst.msk [vmem:[%s1055 + $0x20] sm:$0xff] %vm132, %v1051
      %1061 = vst.msk [vmem:[%s1055 + $0x28] sm:$0xff] %vm132, %v1052
      %1062 = vst.msk [vmem:[%s1055 + $0x30] sm:$0xff] %vm132, %v1053
      %1063 = vst.msk [vmem:[%s1055 + $0x38] sm:$0xff] %vm132, %v1054
    $region54: #{tpu_custom_call.1} parent=1 // loop_footer
      %s87 = sadd.s32 1, %s83
    $region55: #{tpu_custom_call.1} parent=1 // loop_footer_branch
      %82 = sbr.rel target = $region51
    $region56: #{tpu_custom_call.1} parent=1 // loop_exit
      _
    // Predicated region
    $region57: #{tpu_custom_call.1} parent=1 // pred_check
      _
    $region58: #{tpu_custom_call.1} parent=1 // pred_check_branch
      %1065 = sbr.rel (0) target = $region60
    $region59: #{tpu_custom_call.1} parent=1 // pred_region
      %s1067 = ssub.s32 2048, 2048
      %1068 = vsyncadd [#allocation3], %s1067
      %s1069 = sshll.u32 [#allocation5], 4
      %s1070 = int_to_ptr.vmem [resolvable:$true] %s1069
      %1075 = dma.vmem_to_hbm [thread:$0]  %s1070, 2048, %s11, [#allocation3], 128, 128, 8
    $region60: #{tpu_custom_call.1} parent=1 // pred_fallthru
      _
    // Predicated region
    $region61: #{tpu_custom_call.1} parent=1 // pred_check
      _
    $region62: #{tpu_custom_call.1} parent=1 // pred_check_branch
      %1077 = sbr.rel (0) target = $region64
    $region63: #{tpu_custom_call.1} parent=1 // pred_region
      %1078 = dma.done [#allocation3], 2048
    $region64: #{tpu_custom_call.1} parent=1 // pred_fallthru
      _
    %1079 = vsyncpa [#allocation3], 1
    %1080 = vsyncpa [#allocation4], 1

</llo_original>
